<compile_context>
chip_gen: v7x
topology: tpu7x:2x2x1
jax: 0.10.0
libtpu: 0.0.40
codegen_flags: <defaults>
</compile_context>

<pallas_src>
import functools

import numpy as np
import jax
import jax.numpy as jnp
from jax import lax
from jax.experimental import pallas as pl
from jax.experimental.pallas import tpu as pltpu


# ----------------------------------------------------------------------------
# helpers
# ----------------------------------------------------------------------------

def _dot(a, b):
    return jnp.dot(a, b, preferred_element_type=jnp.float32)


# ----------------------------------------------------------------------------
# Spec module kernel: GraphConvSparse_adj.forward
# ----------------------------------------------------------------------------

def _graph_conv_kernel(x_ref, w_ref, adj_ref, o_ref, *, activation):
    # activation(adj @ (x @ W)); whole-array VMEM blocks, canonical matmuls.
    o_ref[...] = activation(_dot(adj_ref[...], _dot(x_ref[...], w_ref[...])))


def graph_conv_sparse_adj(x, w, adj, activation=jax.nn.relu):
    """Pallas equivalent of GraphConvSparse_adj.forward(x, adj)."""
    out_shape = jax.ShapeDtypeStruct((adj.shape[0], w.shape[1]), jnp.float32)
    return pl.pallas_call(
        functools.partial(_graph_conv_kernel, activation=activation),
        out_shape=out_shape,
    )(x, w, adj)


# ----------------------------------------------------------------------------
# Fused VBGAE_adj forward: 1 pallas_call, 5 outputs
# ----------------------------------------------------------------------------

def _vbgae_fused_kernel(sidx_ref,                                   # SMEM prefetch
                        x1_ref, x2_ref, adj_ref, adjt_ref,
                        wb1_ref, wm1_ref, wls1_ref,
                        wb2_ref, wm2_ref, wls2_ref,
                        n1_ref, n2_ref, n3_ref,
                        a_ref, a2_ref, z1_ref, z2_ref, z3_ref,      # outputs
                        z1b_scr,                                    # VMEM scratch
                        *, latent, grdpg, n_species):
    adj = adj_ref[...]      # [N1, N2]
    adjt = adjt_ref[...]    # [N2, N1]  (precomputed -> all matmuls canonical)

    # ---- encoder 1 (X1 path): hidden lives on the N2 side, head on N1 ------
    h1 = jnp.maximum(_dot(adjt, _dot(x1_ref[...], wb1_ref[...])), 0.0)  # [N2,h1]
    mean1 = _dot(adj, _dot(h1, wm1_ref[...]))                           # [N1,L]
    std1 = jnp.exp(_dot(adj, _dot(h1, wls1_ref[...])))                  # [N1,L]
    z1 = n1_ref[...] * std1 + mean1
    z1b = n3_ref[...] * std1 + mean1          # shares mean/logstd with z1
    z1_ref[...] = z1
    z1b_scr[...] = z1b

    # ---- encoder 2 (X2 path): hidden on the N1 side, head on N2 ------------
    h2 = jnp.maximum(_dot(adj, _dot(x2_ref[...], wb2_ref[...])), 0.0)   # [N1,h2]
    mean2 = _dot(adjt, _dot(h2, wm2_ref[...]))                          # [N2,L]
    std2 = jnp.exp(_dot(adjt, _dot(h2, wls2_ref[...])))                 # [N2,L]
    z2 = n2_ref[...] * std2 + mean2
    z2_ref[...] = z2

    # ---- in-kernel species gather from SMEM indices (short unrolled loop) --
    rows = [z1b_scr[pl.ds(sidx_ref[i], 1), :] for i in range(n_species)]
    z3 = jnp.concatenate(rows, axis=0)        # [n_species, L]
    z3_ref[...] = z3

    # ---- GRDPG decode: fold signs into Z2 ONCE, one transpose, two
    #      canonical matmuls sharing the transposed operand ------------------
    if grdpg > 0:
        # TODO(synk): -1 on the LAST `grdpg` latent dims; verify against the
        # torch I_pq convention (some variants negate the first q dims).
        lane = lax.broadcasted_iota(jnp.int32, (1, latent), 1)
        signs = jnp.where(lane >= latent - grdpg, -1.0, 1.0)
        z2s = z2 * signs
    else:
        z2s = z2
    z2s_t = z2s.T                             # [L, N2], single XLU transpose
    a_ref[...] = jax.nn.sigmoid(_dot(z1, z2s_t))
    a2_ref[...] = jax.nn.sigmoid(_dot(z3, z2s_t))


@functools.partial(jax.jit, static_argnames=("grdpg",))
def vbgae_adj_forward(params, X1, X2, adj, noise1, noise2, noise3,
                      species_idx, *, grdpg):
    N1, N2 = adj.shape
    latent = params["w_mean1"].shape[1]
    n_species = species_idx.shape[0]
    d1, h1d = params["w_base1"].shape
    d2, h2d = params["w_base2"].shape

    # adj.T is tiny and reused 4x inside the kernel: precompute once so every
    # in-kernel contraction is a plain [M,K]@[K,N] MXU push (no XLU transpose).
    adjT = adj.T

    arrays = (X1, X2, adj, adjT,
              params["w_base1"], params["w_mean1"], params["w_logstd1"],
              params["w_base2"], params["w_mean2"], params["w_logstd2"],
              noise1, noise2, noise3)

    out_shapes = (
        jax.ShapeDtypeStruct((N1, N2), jnp.float32),              # A_pred
        jax.ShapeDtypeStruct((n_species, N2), jnp.float32),       # A_pred2
        jax.ShapeDtypeStruct((N1, latent), jnp.float32),          # Z1
        jax.ShapeDtypeStruct((N2, latent), jnp.float32),          # Z2
        jax.ShapeDtypeStruct((n_species, latent), jnp.float32),   # Z3
    )

    # whole-array VMEM blocks (everything is far below VMEM capacity)
    in_specs = [pl.BlockSpec(a.shape, lambda i, s: (0, 0)) for a in arrays]
    out_specs = tuple(pl.BlockSpec(o.shape, lambda i, s: (0, 0))
                      for o in out_shapes)

    # advisory cost estimate for XLA scheduling around the custom call
    flops = 2 * (N1 * d1 * h1d + N2 * N1 * h1d
                 + 2 * (N2 * h1d * latent + N1 * N2 * latent)
                 + N2 * d2 * h2d + N1 * N2 * h2d
                 + 2 * (N1 * h2d * latent + N2 * N1 * latent)
                 + N1 * latent * N2 + n_species * latent * N2)
    transcendentals = (N1 * latent + N2 * latent + N1 * N2 + n_species * N2)
    bytes_accessed = 4 * (sum(int(np.prod(a.shape)) for a in arrays)
                          + sum(int(np.prod(o.shape)) for o in out_shapes)
                          + int(n_species))

    return pl.pallas_call(
        functools.partial(_vbgae_fused_kernel, latent=int(latent),
                          grdpg=int(grdpg), n_species=int(n_species)),
        grid_spec=pltpu.PrefetchScalarGridSpec(
            num_scalar_prefetch=1,
            grid=(1,),
            in_specs=in_specs,
            out_specs=out_specs,
            scratch_shapes=[pltpu.VMEM((N1, latent), jnp.float32)],
        ),
        out_shape=out_shapes,
        compiler_params=pltpu.CompilerParams(
            dimension_semantics=("arbitrary",)),
        cost_estimate=pl.CostEstimate(flops=flops,
                                      transcendentals=transcendentals,
                                      bytes_accessed=bytes_accessed),
    )(species_idx, *arrays)


# ----------------------------------------------------------------------------
# Pure-JAX reference (for correctness checking only)
# ----------------------------------------------------------------------------

def _vbgae_ref(params, X1, X2, adj, n1, n2, n3, species_idx, grdpg):
    hp = lambda a, b: jnp.dot(a, b, precision="highest")
    h1 = jax.nn.relu(hp(adj.T, hp(X1, params["w_base1"])))
    mean1 = hp(adj, hp(h1, params["w_mean1"]))
    std1 = jnp.exp(hp(adj, hp(h1, params["w_logstd1"])))
    Z1 = n1 * std1 + mean1
    Z1b = n3 * std1 + mean1
    h2 = jax.nn.relu(hp(adj, hp(X2, params["w_base2"])))
    mean2 = hp(adj.T, hp(h2, params["w_mean2"]))
    std2 = jnp.exp(hp(adj.T, hp(h2, params["w_logstd2"])))
    Z2 = n2 * std2 + mean2
    Z3 = Z1b[species_idx]
    latent = Z1.shape[1]
    signs = jnp.where(jnp.arange(latent) >= latent - grdpg, -1.0, 1.0)
    A = jax.nn.sigmoid(hp(Z1 * signs, Z2.T))
    A2 = jax.nn.sigmoid(hp(Z3 * signs, Z2.T))
    return A, A2, Z1, Z2, Z3


# ----------------------------------------------------------------------------
# Parameter init (torch glorot_init equivalent)
# ----------------------------------------------------------------------------

def glorot_init(key, in_dim, out_dim):
    r = float(np.sqrt(6.0 / (in_dim + out_dim)))
    return jax.random.uniform(key, (in_dim, out_dim), jnp.float32, -r, r)


def init_params(key, input_dim1, input_dim2, h1_dim1, h1_dim2, latent_dim):
    ks = jax.random.split(key, 6)
    return dict(
        w_base1=glorot_init(ks[0], input_dim1, h1_dim1),
        w_mean1=glorot_init(ks[1], h1_dim1, latent_dim),
        w_logstd1=glorot_init(ks[2], h1_dim1, latent_dim),
        w_base2=glorot_init(ks[3], input_dim2, h1_dim2),
        w_mean2=glorot_init(ks[4], h1_dim2, latent_dim),
        w_logstd2=glorot_init(ks[5], h1_dim2, latent_dim),
    )


# ----------------------------------------------------------------------------
# main
# ----------------------------------------------------------------------------

if __name__ == "__main__":
    N1, N2 = 8, 16
    input_dim1, input_dim2 = 12, 10
    hidden1_dim1, hidden1_dim2 = 32, 32
    latent_dim = 16
    GRDPG = 1

    key = jax.random.PRNGKey(0)
    k_p, k_x1, k_x2, k_adj, k_n1, k_n2, k_n3 = jax.random.split(key, 7)

    params = init_params(k_p, input_dim1, input_dim2,
                         hidden1_dim1, hidden1_dim2, latent_dim)

    X1 = jax.random.normal(k_x1, (N1, input_dim1), jnp.float32)
    X2 = jax.random.normal(k_x2, (N2, input_dim2), jnp.float32)
    adj = (jax.random.uniform(k_adj, (N1, N2)) < 0.3).astype(jnp.float32)

    # reparameterization noise (torch.randn equivalents)
    noise1 = jax.random.normal(k_n1, (N1, latent_dim), jnp.float32)
    noise2 = jax.random.normal(k_n2, (N2, latent_dim), jnp.float32)
    noise3 = jax.random.normal(k_n3, (N1, latent_dim), jnp.float32)

    # TODO(synk): species1.groupby(...).sample(1) stays host-side numpy glue;
    # only the resulting per-species row indices enter the kernel (via SMEM).
    species = np.array([0, 0, 1, 1, 2, 2, 3, 3])
    rng = np.random.default_rng(0)
    species_idx = jnp.asarray(
        [int(rng.choice(np.where(species == s)[0])) for s in np.unique(species)],
        dtype=jnp.int32)
    n_species = int(species_idx.shape[0])

    # --- spec module on its own: activation(adj @ (x @ W)) ------------------
    gcn_out = graph_conv_sparse_adj(X2, params["w_base2"], adj)
    gcn_ref = jnp.maximum(
        jnp.dot(adj, jnp.dot(X2, params["w_base2"], precision="highest"),
                precision="highest"), 0.0)
    np.testing.assert_allclose(np.asarray(gcn_out), np.asarray(gcn_ref),
                               rtol=2e-3, atol=2e-3)
    assert gcn_out.shape == (N1, hidden1_dim2)

    # --- full VBGAE_adj forward: ONE fused pallas_call -----------------------
    outs = vbgae_adj_forward(params, X1, X2, adj, noise1, noise2, noise3,
                             species_idx, grdpg=GRDPG)
    outs = jax.block_until_ready(outs)
    A_pred, A_pred2, Z1, Z2, Z3 = outs

    refs = _vbgae_ref(params, X1, X2, adj, noise1, noise2, noise3,
                      species_idx, GRDPG)
    for got, want in zip(outs, refs):
        np.testing.assert_allclose(np.asarray(got), np.asarray(want),
                                   rtol=2e-3, atol=2e-3)

    assert A_pred.shape == (N1, N2)
    assert A_pred2.shape == (n_species, N2)
    assert Z1.shape == (N1, latent_dim)
    assert Z2.shape == (N2, latent_dim)
    assert Z3.shape == (n_species, latent_dim)
    assert bool(jnp.all(jnp.isfinite(A_pred)))
    assert bool(jnp.all(jnp.isfinite(A_pred2)))

    print("KERNEL_OK")
</pallas_src>

<mosaic_0001>
module attributes {stable_mosaic.version = 11 : i64} {
  func.func @_graph_conv_kernel(%arg0: memref<16x10xf32, #tpu.memory_space<vmem>>, %arg1: memref<10x32xf32, #tpu.memory_space<vmem>>, %arg2: memref<8x16xf32, #tpu.memory_space<vmem>>, %arg3: memref<8x32xf32, #tpu.memory_space<vmem>>) attributes {dimension_semantics = [], scalar_prefetch = 0 : i64, scratch_operands = 0 : i64, tpu.core_type = #tpu.core_type<tc>} {
    %c0 = arith.constant 0 : index
    %c0_0 = arith.constant 0 : index
    %0 = vector.load %arg2[%c0, %c0_0] : memref<8x16xf32, #tpu.memory_space<vmem>>, vector<8x16xf32>
    %c0_1 = arith.constant 0 : index
    %c0_2 = arith.constant 0 : index
    %1 = vector.load %arg0[%c0_1, %c0_2] : memref<16x10xf32, #tpu.memory_space<vmem>>, vector<16x10xf32>
    %c0_3 = arith.constant 0 : index
    %c0_4 = arith.constant 0 : index
    %2 = vector.load %arg1[%c0_3, %c0_4] : memref<10x32xf32, #tpu.memory_space<vmem>>, vector<10x32xf32>
    %cst = arith.constant dense<0.000000e+00> : vector<16x32xf32>
    %3 = tpu.matmul %1, %2, %cst {dimension_numbers = #tpu.dot_dimension_numbers<[1], [0], [0], [1], [0, 0, 1, 1], [], []>} : vector<16x10xf32>, vector<10x32xf32>, vector<16x32xf32> -> vector<16x32xf32>
    %cst_5 = arith.constant dense<0.000000e+00> : vector<8x32xf32>
    %4 = tpu.matmul %0, %3, %cst_5 {dimension_numbers = #tpu.dot_dimension_numbers<[1], [0], [0], [1], [0, 0, 1, 1], [], []>} : vector<8x16xf32>, vector<16x32xf32>, vector<8x32xf32> -> vector<8x32xf32>
    %cst_6 = arith.constant 0.000000e+00 : f32
    %5 = vector.broadcast %cst_6 : f32 to vector<8x32xf32>
    %6 = arith.maximumf %4, %5 : vector<8x32xf32>
    %c0_7 = arith.constant 0 : index
    %c0_8 = arith.constant 0 : index
    %7 = vector.load %arg3[%c0_7, %c0_8] : memref<8x32xf32, #tpu.memory_space<vmem>>, vector<8x32xf32>
    tpu.vector_store %arg3[%c0_7, %c0_8], %6 {strides = array<i32>} : memref<8x32xf32, #tpu.memory_space<vmem>>, vector<8x32xf32>,
    return
  }
}

</mosaic_0001>

<llo_original>
// kernel: tpu_custom_call.1
$region0: #{tpu_custom_call.1}
  #allocation0 [shape = 'u32[]', space=smem, size = 0x4, offset = 0x4, fixed_abs, tag = 'smem constant byte address 0x4 - core index']
  #allocation1 [shape = 'u32[144,128]{1,0:T(1,128)}', space=vmem, size = 0x12000, scoped, tag = 'internal scratch']
  %s0 = inlined_call_operand.hbm [shape: f32[16,10], index: 0, kind: input, shape index: {}]
  %s1 = inlined_call_operand.hbm [shape: f32[10,32], index: 1, kind: input, shape index: {}]
  %s2 = inlined_call_operand.hbm [shape: f32[8,16], index: 2, kind: input, shape index: {}]
  %s3 = inlined_call_operand.hbm [shape: f32[8,32], index: 3, kind: output, shape index: {}]
  %s4 = sld [smem:[#allocation0]]
  $region34: #{tpu_custom_call.1} parent=0
    _
  %s6 = ssub.s32 1, %s4
  %s7 = scalar_select 0, %s6, %s4
  $region1: #{tpu_custom_call.1} parent=0
    #allocation2 [shape = 'u8[8192]{0}', space=vmem, size = 0x2000, scoped, tag = 'input window, operand 0, single buffered']
    #allocation3 [shape = 's32[1]{0}', space=sflag, size = 0x4, scoped, tag = 'scoped memory for tpu_custom_call.1']
    #allocation4 [shape = 's32[1]{0}', space=sflag, size = 0x4, scoped, tag = 'scoped memory for tpu_custom_call.1']
    #allocation5 [shape = 'u8[8192]{0}', space=vmem, size = 0x2000, scoped, tag = 'input window, operand 1, single buffered']
    #allocation6 [shape = 's32[1]{0}', space=sflag, size = 0x4, scoped, tag = 'scoped memory for tpu_custom_call.1']
    #allocation7 [shape = 'u8[4096]{0}', space=vmem, size = 0x1000, scoped, tag = 'input window, operand 2, single buffered']
    #allocation8 [shape = 'u8[4096]{0}', space=vmem, size = 0x1000, scoped, tag = 'output window, operand 0, single buffered']
    %8 = vsyncpa [#allocation3], 0
    %9 = vsyncpa [#allocation6], 0
    %10 = vsyncpa [#allocation4], 0
    // Predicated region
    $region2: #{tpu_custom_call.1} parent=1 // pred_check
      _
    $region3: #{tpu_custom_call.1} parent=1 // pred_check_branch
      %12 = sbr.rel (0) target = $region5
    $region4: #{tpu_custom_call.1} parent=1 // pred_region
      %s14 = ssub.s32 256, 256
      %15 = vsyncadd [#allocation3], %s14
      %s16 = sshll.u32 [#allocation2], 4
      %s17 = int_to_ptr.vmem [resolvable:$true] %s16
      %22 = dma.hbm_to_vmem [thread:$0]  %s0, 256, %s17, [#allocation3], 128, 128, 8
    $region5: #{tpu_custom_call.1} parent=1 // pred_fallthru
      _
    // Predicated region
    $region6: #{tpu_custom_call.1} parent=1 // pred_check
      _
    $region7: #{tpu_custom_call.1} parent=1 // pred_check_branch
      %24 = sbr.rel (0) target = $region9
    $region8: #{tpu_custom_call.1} parent=1 // pred_region
      %s26 = ssub.s32 256, 256
      %27 = vsyncadd [#allocation6], %s26
      %s28 = sshll.u32 [#allocation5], 4
      %s29 = int_to_ptr.vmem [resolvable:$true] %s28
      %34 = dma.hbm_to_vmem [thread:$0]  %s1, 256, %s29, [#allocation6], 128, 128, 8
    $region9: #{tpu_custom_call.1} parent=1 // pred_fallthru
      _
    // Predicated region
    $region10: #{tpu_custom_call.1} parent=1 // pred_check
      _
    $region11: #{tpu_custom_call.1} parent=1 // pred_check_branch
      %36 = sbr.rel (0) target = $region13
    $region12: #{tpu_custom_call.1} parent=1 // pred_region
      %s38 = ssub.s32 128, 128
      %39 = vsyncadd [#allocation6], %s38
      %s41 = sshll.u32 [#allocation7], 4
      %s42 = int_to_ptr.vmem [resolvable:$true] %s41
      %44 = dma.hbm_to_vmem [thread:$0]  %s2, 128, %s42, [#allocation6]
    $region13: #{tpu_custom_call.1} parent=1 // pred_fallthru
      _
    // Predicated region
    $region14: #{tpu_custom_call.1} parent=1 // pred_check
      _
    $region15: #{tpu_custom_call.1} parent=1 // pred_check_branch
      %46 = sbr.rel (0) target = $region17
    $region16: #{tpu_custom_call.1} parent=1 // pred_region
      %47 = dma.done [#allocation3], 256
    $region17: #{tpu_custom_call.1} parent=1 // pred_fallthru
      _
    // Predicated region
    $region18: #{tpu_custom_call.1} parent=1 // pred_check
      _
    $region19: #{tpu_custom_call.1} parent=1 // pred_check_branch
      %49 = sbr.rel (0) target = $region21
    $region20: #{tpu_custom_call.1} parent=1 // pred_region
      %50 = dma.done [#allocation6], 256
    $region21: #{tpu_custom_call.1} parent=1 // pred_fallthru
      _
    // Predicated region
    $region22: #{tpu_custom_call.1} parent=1 // pred_check
      _
    $region23: #{tpu_custom_call.1} parent=1 // pred_check_branch
      %52 = sbr.rel (0) target = $region25
    $region24: #{tpu_custom_call.1} parent=1 // pred_region
      %53 = dma.done [#allocation6], 128
    $region25: #{tpu_custom_call.1} parent=1 // pred_fallthru
      _
    %v54 = vld [vmem:[#allocation7] sm:$0xff]
    %v55 = vld [vmem:[#allocation2] sm:$0xff]
    %v56 = vld [vmem:[#allocation2 + $0x8] sm:$0xff]
    %v57 = vld [vmem:[#allocation5] sm:$0xff]
    %v58 = vld [vmem:[#allocation5 + $0x8] sm:$0x3]
    %vm59 = vcmask 80896
    %v61 = vsel %vm59, %v55, 0
    %v64 = vsel %vm59, %v56, 0
    %vm66 = vcmask 1041408
    %v68 = vsel %vm66, %v58, 0
    %70 = vmatprep.subr.mxu0 0.0
    %71 = vmatpush1.msra.mxu0 %v57
    %72 = vmatprep.subr.mxu0 0.0
    %73 = vmatpush1.msra.mxu0 %v68
    %74 = vmatprep.subr.mxu0 0.0
    %75 = vmatpush1.msra.mxu0 0.0
    %76 = vmatprep.subr.mxu0 0.0
    %77 = vmatpush1.msra.mxu0 0.0
    %78 = vmatprep.subr.mxu0 0.0
    %79 = vmatpush1.msra.mxu0 0.0
    %80 = vmatprep.subr.mxu0 0.0
    %81 = vmatpush1.msra.mxu0 0.0
    %82 = vmatprep.subr.mxu0 0.0
    %83 = vmatpush1.msra.mxu0 0.0
    %84 = vmatprep.subr.mxu0 0.0
    %85 = vmatpush1.msra.mxu0 0.0
    %86 = vmatprep.subr.mxu0 0.0
    %87 = vmatpush1.msra.mxu0 0.0
    %88 = vmatprep.subr.mxu0 0.0
    %89 = vmatpush1.msra.mxu0 0.0
    %90 = vmatprep.subr.mxu0 0.0
    %91 = vmatpush1.msra.mxu0 0.0
    %92 = vmatprep.subr.mxu0 0.0
    %93 = vmatpush1.msra.mxu0 0.0
    %94 = vmatprep.subr.mxu0 0.0
    %95 = vmatpush1.msra.mxu0 0.0
    %96 = vmatprep.subr.mxu0 0.0
    %97 = vmatpush1.msra.mxu0 0.0
    %98 = vmatprep.subr.mxu0 0.0
    %99 = vmatpush1.msra.mxu0 0.0
    %100 = vmatprep.subr.mxu0 0.0
    %101 = vmatpush1.msra.mxu0 0.0
    %102 = vmatprep.subr.mxu0 0.0
    %103 = vmatpush1.msra.mxu0 0.0
    %104 = vmatprep.subr.mxu0 0.0
    %105 = vmatpush1.msra.mxu0 0.0
    %106 = vmatprep.subr.mxu0 0.0
    %107 = vmatpush1.msra.mxu0 0.0
    %108 = vmatprep.subr.mxu0 0.0
    %109 = vmatpush1.msra.mxu0 0.0
    %110 = vmatprep.subr.mxu0 0.0
    %111 = vmatpush1.msra.mxu0 0.0
    %112 = vmatprep.subr.mxu0 0.0
    %113 = vmatpush1.msra.mxu0 0.0
    %114 = vmatprep.subr.mxu0 0.0
    %115 = vmatpush1.msra.mxu0 0.0
    %116 = vmatprep.subr.mxu0 0.0
    %117 = vmatpush1.msra.mxu0 0.0
    %118 = vmatprep.subr.mxu0 0.0
    %119 = vmatpush1.msra.mxu0 0.0
    %120 = vmatprep.subr.mxu0 0.0
    %121 = vmatpush1.msra.mxu0 0.0
    %122 = vmatprep.subr.mxu0 0.0
    %123 = vmatpush1.msra.mxu0 0.0
    %124 = vmatprep.subr.mxu0 0.0
    %125 = vmatpush1.msra.mxu0 0.0
    %126 = vmatprep.subr.mxu0 0.0
    %127 = vmatpush1.msra.mxu0 0.0
    %128 = vmatprep.subr.mxu0 0.0
    %129 = vmatpush1.msra.mxu0 0.0
    %130 = vmatprep.subr.mxu0 0.0
    %131 = vmatpush1.msra.mxu0 0.0
    %132 = vmatprep.subr.mxu0 0.0
    %133 = vmatpush1.msra.mxu0 0.0
    %134 = vmatprep.mubr.f32.mxu0 0.0
    %135 = vmatmul.mubr.f32.gmra.mrb[0].mxu0 %v61
    %v136 = vpop.f32.mrb[0].mxu0
    %v137 = vadd.f32 0.0, %v136
    %v138 = vpop.f32.mrb[0].mxu0
    %139 = vmatprep.mubr.f32.mxu0 0.0
    %140 = vmatmul.mubr.f32.gmra.mrb[0].mxu0 %v64
    %v141 = vpop.f32.mrb[0].mxu0
    %v142 = vadd.f32 0.0, %v141
    %v143 = vpop.f32.mrb[0].mxu0
    %144 = vdwg.mxu0
    %vm145 = vcmask 130048
    %v147 = vsel %vm145, %v54, 0
    %149 = vmatprep.subr.mxu0 0.0
    %150 = vmatpush1.msra.mxu0 %v137
    %151 = vmatprep.subr.mxu0 0.0
    %152 = vmatpush1.msra.mxu0 %v142
    %153 = vmatprep.subr.mxu0 0.0
    %154 = vmatpush1.msra.mxu0 0.0
    %155 = vmatprep.subr.mxu0 0.0
    %156 = vmatpush1.msra.mxu0 0.0
    %157 = vmatprep.subr.mxu0 0.0
    %158 = vmatpush1.msra.mxu0 0.0
    %159 = vmatprep.subr.mxu0 0.0
    %160 = vmatpush1.msra.mxu0 0.0
    %161 = vmatprep.subr.mxu0 0.0
    %162 = vmatpush1.msra.mxu0 0.0
    %163 = vmatprep.subr.mxu0 0.0
    %164 = vmatpush1.msra.mxu0 0.0
    %165 = vmatprep.subr.mxu0 0.0
    %166 = vmatpush1.msra.mxu0 0.0
    %167 = vmatprep.subr.mxu0 0.0
    %168 = vmatpush1.msra.mxu0 0.0
    %169 = vmatprep.subr.mxu0 0.0
    %170 = vmatpush1.msra.mxu0 0.0
    %171 = vmatprep.subr.mxu0 0.0
    %172 = vmatpush1.msra.mxu0 0.0
    %173 = vmatprep.subr.mxu0 0.0
    %174 = vmatpush1.msra.mxu0 0.0
    %175 = vmatprep.subr.mxu0 0.0
    %176 = vmatpush1.msra.mxu0 0.0
    %177 = vmatprep.subr.mxu0 0.0
    %178 = vmatpush1.msra.mxu0 0.0
    %179 = vmatprep.subr.mxu0 0.0
    %180 = vmatpush1.msra.mxu0 0.0
    %181 = vmatprep.subr.mxu0 0.0
    %182 = vmatpush1.msra.mxu0 0.0
    %183 = vmatprep.subr.mxu0 0.0
    %184 = vmatpush1.msra.mxu0 0.0
    %185 = vmatprep.subr.mxu0 0.0
    %186 = vmatpush1.msra.mxu0 0.0
    %187 = vmatprep.subr.mxu0 0.0
    %188 = vmatpush1.msra.mxu0 0.0
    %189 = vmatprep.subr.mxu0 0.0
    %190 = vmatpush1.msra.mxu0 0.0
    %191 = vmatprep.subr.mxu0 0.0
    %192 = vmatpush1.msra.mxu0 0.0
    %193 = vmatprep.subr.mxu0 0.0
    %194 = vmatpush1.msra.mxu0 0.0
    %195 = vmatprep.subr.mxu0 0.0
    %196 = vmatpush1.msra.mxu0 0.0
    %197 = vmatprep.subr.mxu0 0.0
    %198 = vmatpush1.msra.mxu0 0.0
    %199 = vmatprep.subr.mxu0 0.0
    %200 = vmatpush1.msra.mxu0 0.0
    %201 = vmatprep.subr.mxu0 0.0
    %202 = vmatpush1.msra.mxu0 0.0
    %203 = vmatprep.subr.mxu0 0.0
    %204 = vmatpush1.msra.mxu0 0.0
    %205 = vmatprep.subr.mxu0 0.0
    %206 = vmatpush1.msra.mxu0 0.0
    %207 = vmatprep.subr.mxu0 0.0
    %208 = vmatpush1.msra.mxu0 0.0
    %209 = vmatprep.subr.mxu0 0.0
    %210 = vmatpush1.msra.mxu0 0.0
    %211 = vmatprep.subr.mxu0 0.0
    %212 = vmatpush1.msra.mxu0 0.0
    %213 = vmatprep.mubr.f32.mxu0 0.0
    %214 = vmatmul.mubr.f32.gmra.mrb[0].mxu0 %v147
    %v215 = vpop.f32.mrb[0].mxu0
    %v216 = vadd.f32 0.0, %v215
    %v217 = vpop.f32.mrb[0].mxu0
    %218 = vdwg.mxu0
    %v219 = vmax.f32 %v216, 0.0
    %vm220 = vcmask 261120
    %221 = vst.msk [vmem:[#allocation8] sm:$0xff] %vm220, %v219
    // Predicated region
    $region26: #{tpu_custom_call.1} parent=1 // pred_check
      _
    $region27: #{tpu_custom_call.1} parent=1 // pred_check_branch
      %223 = sbr.rel (0) target = $region29
    $region28: #{tpu_custom_call.1} parent=1 // pred_region
      %s225 = ssub.s32 128, 128
      %226 = vsyncadd [#allocation4], %s225
      %s228 = sshll.u32 [#allocation8], 4
      %s229 = int_to_ptr.vmem [resolvable:$true] %s228
      %231 = dma.vmem_to_hbm [thread:$0]  %s229, 128, %s3, [#allocation4]
    $region29: #{tpu_custom_call.1} parent=1 // pred_fallthru
      _
    // Predicated region
    $region30: #{tpu_custom_call.1} parent=1 // pred_check
      _
    $region31: #{tpu_custom_call.1} parent=1 // pred_check_branch
      %233 = sbr.rel (0) target = $region33
    $region32: #{tpu_custom_call.1} parent=1 // pred_region
      %234 = dma.done [#allocation4], 128
    $region33: #{tpu_custom_call.1} parent=1 // pred_fallthru
      _
    %235 = vsyncpa [#allocation3], 1
    %236 = vsyncpa [#allocation6], 1
    %237 = vsyncpa [#allocation4], 1

</llo_original>
